<compile_context>
chip_gen: v5e
topology: v5e:2x2
jax: 0.10.0
libtpu: 0.0.40
codegen_flags: <defaults>
</compile_context>

<pallas_src>
import functools

import jax
import jax.numpy as jnp
from jax import lax
from jax.experimental import pallas as pl
from jax.experimental.pallas import tpu as pltpu


# ----------------------------------------------------------------------------
# Small helpers
# ----------------------------------------------------------------------------
def _round_up(n, m):
    return ((n + m - 1) // m) * m


def _cdiv(a, b):
    return -(-a // b)


def _sublane_mult(dtype):
    # Min second-to-last-dim packing multiple: f32 -> 8, bf16/f16 -> 16, i8 -> 32.
    return max(8, 32 // jnp.dtype(dtype).itemsize)


def _pad_to(x, axis, mult):
    size = x.shape[axis]
    pad = (-size) % mult
    if pad == 0:
        return x
    widths = [(0, 0)] * x.ndim
    widths[axis] = (0, pad)
    return jnp.pad(x, widths)


def _fit_tile(dim, target, align):
    """Tile size for `dim`: a multiple of `align`, <= target, preferring an
    exact divisor of the align-rounded dim so the wrapper never has to pad the
    (potentially vocab-sized) operand up to a full tile."""
    target = max(align, (target // align) * align)
    dim_r = _round_up(dim, align)
    if dim_r <= target:
        return dim_r
    t = target
    floor = max(align, target // 2)
    while t >= floor:
        if dim_r % t == 0:
            return t
        t -= align
    return target


def _vmem_limits():
    """(tile_budget_bytes, vmem_limit_bytes) for the current TPU generation."""
    try:
        cap = int(pltpu.get_tpu_info().vmem_capacity_bytes)
    except Exception:
        cap = 64 * 1024 * 1024  # conservative fallback (v7x per-TC VMEM)
    limit = min(int(cap * 0.8), 100 * 1024 * 1024)  # v7x ~51 MiB, v5e/v6e 100 MiB
    budget = limit - 6 * 1024 * 1024                # headroom for internal scratch
    return budget, limit


def _select_tiles(M, K, N, x_dtype, out_dtype, *, has_bias, budget,
                  tm=None, tn=None, tk=None):
    mb = max(_sublane_mult(x_dtype), _sublane_mult(out_dtype))
    xb = jnp.dtype(x_dtype).itemsize
    ob = jnp.dtype(out_dtype).itemsize
    need_scratch = jnp.dtype(out_dtype) != jnp.dtype(jnp.float32)

    Mr = _round_up(M, mb)
    Nr = _round_up(N, 128)
    Kr = _round_up(K, 128)

    # Explicit overrides win (clamped to the alignment-rounded problem dims).
    if tm is not None or tn is not None or tk is not None:
        tm_ = min(tm, Mr) if tm is not None else _fit_tile(M, 512, mb)
        tn_ = min(tn, Nr) if tn is not None else _fit_tile(N, 512, 128)
        tk_ = min(tk, Kr) if tk is not None else _fit_tile(K, 1024, 128)
        return tm_, tn_, tk_

    def ws(tm_, tn_, tk_):
        s = 2 * tm_ * tk_ * xb        # x tile, double-buffered
        s += 2 * tn_ * tk_ * xb       # tied weight tile, double-buffered
        s += 2 * tm_ * tn_ * ob       # output tile, double-buffered
        if need_scratch:
            s += tm_ * tn_ * 4        # f32 accumulator scratch (bf16/f16 out only)
        if has_bias:
            s += 2 * tn_ * 4
        return s

    tm_ = _fit_tile(M, 512, mb)
    tn_ = _fit_tile(N, 512, 128)
    tk_ = _fit_tile(K, 1024, 128)     # keep tk >= 1024 so the f32 acc RMW per
                                      # k-step stays well under MXU time

    # Greedy growth under the per-generation VMEM budget.  tm first: the tied
    # (N, K) weight is fully re-streamed ceil(M/tm) times, the dominant HBM
    # term for vocab-sized N.  Then a larger / full-K tile (a full-K x block
    # is reused across the whole N grid axis), then tn.
    for which, target in (("tm", 1024), ("tk", 2048), ("tm", 2048), ("tn", 1024)):
        if which == "tm":
            cand = _fit_tile(M, target, mb)
            if cand > tm_ and ws(cand, tn_, tk_) <= budget:
                tm_ = cand
        elif which == "tk":
            cand = _fit_tile(K, target, 128)
            if cand > tk_ and ws(tm_, tn_, cand) <= budget:
                tk_ = cand
        else:
            cand = _fit_tile(N, target, 128)
            if cand > tn_ and ws(tm_, cand, tk_) <= budget:
                tn_ = cand

    # Keep both TensorCores busy on dual-core parts (v7x): expose >= 2 blocks
    # on the "parallel" axes when the problem allows (important for small-M
    # decode shapes after growing tm).
    if _cdiv(Mr, tm_) * _cdiv(Nr, tn_) < 2:
        if Nr >= 2 * 128:
            tn_ = _round_up(_cdiv(Nr, 2), 128)
        elif Mr >= 2 * mb:
            tm_ = _round_up(_cdiv(Mr, 2), mb)

    return tm_, tn_, tk_


# ----------------------------------------------------------------------------
# Kernel
# ----------------------------------------------------------------------------
def _tied_projection_kernel(*refs, has_bias, nk, acc_in_out):
    """One (tm, tn) output tile, accumulating over the K grid axis."""
    if acc_in_out:
        # f32 output: accumulate directly into the VMEM-resident output block
        # (its block index is constant over k, so it stays resident).
        if has_bias:
            x_ref, w_ref, b_ref, o_ref = refs
        else:
            x_ref, w_ref, o_ref = refs
        acc_ref = o_ref
    else:
        if has_bias:
            x_ref, w_ref, b_ref, o_ref, acc_ref = refs
        else:
            x_ref, w_ref, o_ref, acc_ref = refs

    k = pl.program_id(2)

    # Native NT contraction: x tile (tm, tk) against the tied weight tile kept
    # in its (N, K) layout (tn, tk).  Mosaic feeds the MXU with the transposed
    # RHS directly -- no host-side weight.T, no per-step XLU transpose.
    p = lax.dot_general(
        x_ref[...],
        w_ref[...],
        dimension_numbers=(((1,), (1,)), ((), ())),
        preferred_element_type=jnp.float32,
    )

    def _finalize(v):
        if has_bias:
            v = v + b_ref[...].astype(jnp.float32)  # broadcast over rows
        return v.astype(o_ref.dtype)

    if nk == 1:
        # Single K step: fully fused single write.
        o_ref[...] = _finalize(p)
    else:
        @pl.when(k == 0)
        def _():
            acc_ref[...] = p

        @pl.when(jnp.logical_and(k > 0, k < nk - 1))
        def _():
            acc_ref[...] += p

        @pl.when(k == nk - 1)
        def _():
            # Fused epilogue: last partial product + bias + downcast in one
            # accumulator-read -> output-write pass.
            o_ref[...] = _finalize(acc_ref[...] + p)


@functools.partial(
    jax.jit, static_argnames=("has_bias", "tm", "tn", "tk", "vmem_limit"))
def _tied_projection_2d(x2d, weight, bias, *, has_bias, tm, tn, tk, vmem_limit):
    M, K = x2d.shape
    N = weight.shape[0]

    # Pads are no-ops (elided under jit) when the tiles divide the dims, which
    # the divisor-preferring tile selection arranges for typical shapes.
    x_p = _pad_to(_pad_to(x2d, 0, tm), 1, tk)
    w_p = _pad_to(_pad_to(weight, 0, tn), 1, tk)   # native (N, K) layout
    Mp, Kp = x_p.shape
    Np = w_p.shape[0]

    grid = (Mp // tm, Np // tn, Kp // tk)
    out_dtype = x2d.dtype
    acc_in_out = jnp.dtype(out_dtype) == jnp.dtype(jnp.float32)

    in_specs = [
        pl.BlockSpec((tm, tk), lambda i, j, k: (i, k)),   # x tile
        pl.BlockSpec((tn, tk), lambda i, j, k: (j, k)),   # tied weight tile (N, K)
    ]
    operands = [x_p, w_p]
    if has_bias:
        b_p = _pad_to(bias.reshape(1, N), 1, tn)
        in_specs.append(pl.BlockSpec((1, tn), lambda i, j, k: (0, j)))
        operands.append(b_p)

    scratch = [] if acc_in_out else [pltpu.VMEM((tm, tn), jnp.float32)]

    kernel = functools.partial(
        _tied_projection_kernel,
        has_bias=has_bias, nk=grid[2], acc_in_out=acc_in_out)

    out_p = pl.pallas_call(
        kernel,
        out_shape=jax.ShapeDtypeStruct((Mp, Np), out_dtype),
        grid_spec=pltpu.PrefetchScalarGridSpec(
            num_scalar_prefetch=0,
            grid=grid,
            in_specs=in_specs,
            out_specs=pl.BlockSpec((tm, tn), lambda i, j, k: (i, j)),
            scratch_shapes=scratch,
        ),
        compiler_params=pltpu.CompilerParams(
            dimension_semantics=("parallel", "parallel", "arbitrary"),
            vmem_limit_bytes=vmem_limit,
        ),
    )(*operands)

    if Mp == M and Np == N:
        return out_p
    return out_p[:M, :N]


def tied_projection(x, weight, bias=None, *, tm=None, tn=None, tk=None):
    """y = x @ weight.T + bias, matching torch.nn.functional.linear."""
    output_dim, input_dim = weight.shape
    assert x.shape[-1] == input_dim

    lead = x.shape[:-1]
    x2d = x.reshape(-1, input_dim)

    # Unify operand dtypes so the NT dot hits the validated MXU lowering path.
    # TODO(synk): for f32 models, streaming x/weight as bf16 (keeping the f32
    # accumulate) would ~halve HBM traffic and lift MXU throughput; left to
    # the caller since it changes numerics.
    if weight.dtype != x2d.dtype:
        weight = weight.astype(x2d.dtype)

    budget, vmem_limit = _vmem_limits()
    tm_, tn_, tk_ = _select_tiles(
        x2d.shape[0], input_dim, output_dim, x2d.dtype, x2d.dtype,
        has_bias=bias is not None, budget=budget, tm=tm, tn=tn, tk=tk)

    y2d = _tied_projection_2d(
        x2d, weight, bias, has_bias=bias is not None,
        tm=tm_, tn=tn_, tk=tk_, vmem_limit=vmem_limit)
    return y2d.reshape(*lead, output_dim)


if __name__ == "__main__":
    key = jax.random.PRNGKey(0)
    kx, kw, kb, kx2, kw2, kb2, kx3, kw3, kb3 = jax.random.split(key, 9)

    # --- Small f32 test, shapes consistent with a Projection: (*, H_inp) -> (*, H_out)
    batch, seq, input_dim, output_dim = 2, 8, 32, 48
    x = jax.random.normal(kx, (batch, seq, input_dim), dtype=jnp.float32)
    weight = jax.random.normal(kw, (output_dim, input_dim), dtype=jnp.float32) * 0.1
    bias = jax.random.normal(kb, (output_dim,), dtype=jnp.float32) * 0.1

    y = jax.block_until_ready(tied_projection(x, weight, bias))
    y_ref = x @ weight.T + bias
    assert y.shape == (batch, seq, output_dim)
    assert jnp.allclose(y, y_ref, atol=1e-5, rtol=1e-5)

    # bias=None path (TiedProjection allows a None bias): no bias DMA / add.
    y_nb = jax.block_until_ready(tied_projection(x, weight, None))
    assert jnp.allclose(y_nb, x @ weight.T, atol=1e-5, rtol=1e-5)

    # --- Multi-tile f32 test (K accumulation directly into the resident f32
    #     output block over several grid steps + multiple N blocks).
    in2, out2 = 256, 384
    x2 = jax.random.normal(kx2, (batch, seq, in2), dtype=jnp.float32)
    w2 = jax.random.normal(kw2, (out2, in2), dtype=jnp.float32) * 0.05
    b2 = jax.random.normal(kb2, (out2,), dtype=jnp.float32) * 0.05

    y2 = jax.block_until_ready(tied_projection(x2, w2, b2, tm=16, tn=128, tk=128))
    y2_ref = x2 @ w2.T + b2
    assert y2.shape == (batch, seq, out2)
    assert jnp.allclose(y2, y2_ref, atol=1e-2, rtol=1e-2)

    # --- bf16 test (exercises the f32 scratch-accumulator path + fused
    #     downcast epilogue).
    x3 = jax.random.normal(kx3, (batch, seq, in2), dtype=jnp.bfloat16)
    w3 = (jax.random.normal(kw3, (out2, in2), dtype=jnp.float32) * 0.05).astype(jnp.bfloat16)
    b3 = (jax.random.normal(kb3, (out2,), dtype=jnp.float32) * 0.05).astype(jnp.bfloat16)

    y3 = jax.block_until_ready(tied_projection(x3, w3, b3, tm=16, tn=128, tk=128))
    y3_ref = (x3.astype(jnp.float32) @ w3.astype(jnp.float32).T
              + b3.astype(jnp.float32))
    assert y3.shape == (batch, seq, out2)
    assert jnp.allclose(y3.astype(jnp.float32), y3_ref, atol=5e-2, rtol=5e-2)

    print("KERNEL_OK")
</pallas_src>

<mosaic_0001>
module attributes {stable_mosaic.version = 11 : i64} {
  func.func @_tied_projection_kernel(%arg0: i32, %arg1: i32, %arg2: i32, %arg3: memref<8x128xf32, #tpu.memory_space<vmem>>, %arg4: memref<128x128xf32, #tpu.memory_space<vmem>>, %arg5: memref<1x128xf32, #tpu.memory_space<vmem>>, %arg6: memref<8x128xf32, #tpu.memory_space<vmem>>) attributes {dimension_semantics = [#tpu.dimension_semantics<parallel>, #tpu.dimension_semantics<parallel>, #tpu.dimension_semantics<arbitrary>], iteration_bounds = array<i64: 2, 1, 1>, scalar_prefetch = 0 : i64, scratch_operands = 0 : i64, tpu.core_type = #tpu.core_type<tc>, window_params = [{transform_indices = @transform_0, window_bounds = array<i64: 8, 128>}, {transform_indices = @transform_1, window_bounds = array<i64: 128, 128>}, {transform_indices = @transform_2, window_bounds = array<i64: 1, 128>}, {transform_indices = @transform_3, window_bounds = array<i64: 8, 128>}]} {
    %c0 = arith.constant 0 : index
    %c0_0 = arith.constant 0 : index
    %0 = vector.load %arg3[%c0, %c0_0] : memref<8x128xf32, #tpu.memory_space<vmem>>, vector<8x128xf32>
    %c0_1 = arith.constant 0 : index
    %c0_2 = arith.constant 0 : index
    %1 = vector.load %arg4[%c0_1, %c0_2] : memref<128x128xf32, #tpu.memory_space<vmem>>, vector<128x128xf32>
    %cst = arith.constant dense<0.000000e+00> : vector<8x128xf32>
    %2 = tpu.matmul %0, %1, %cst {dimension_numbers = #tpu.dot_dimension_numbers<[1], [1], [0], [0], [0, 0, 1, 0], [], []>} : vector<8x128xf32>, vector<128x128xf32>, vector<8x128xf32> -> vector<8x128xf32>
    %c0_3 = arith.constant 0 : index
    %c0_4 = arith.constant 0 : index
    %3 = vector.load %arg5[%c0_3, %c0_4] : memref<1x128xf32, #tpu.memory_space<vmem>>, vector<1x128xf32>
    %4 = vector.broadcast %3 : vector<1x128xf32> to vector<8x128xf32>
    %5 = arith.addf %2, %4 : vector<8x128xf32>
    %c0_5 = arith.constant 0 : index
    %c0_6 = arith.constant 0 : index
    %6 = vector.load %arg6[%c0_5, %c0_6] : memref<8x128xf32, #tpu.memory_space<vmem>>, vector<8x128xf32>
    tpu.vector_store %arg6[%c0_5, %c0_6], %5 {strides = array<i32>} : memref<8x128xf32, #tpu.memory_space<vmem>>, vector<8x128xf32>,
    return
  }
  func.func @transform_0(%arg0: i32, %arg1: i32, %arg2: i32) -> (i32, i32) {
    %c0_i32 = arith.constant 0 : i32
    return %arg0, %arg2 : i32, i32
  }
  func.func @transform_1(%arg0: i32, %arg1: i32, %arg2: i32) -> (i32, i32) {
    %c0_i32 = arith.constant 0 : i32
    return %arg1, %arg2 : i32, i32
  }
  func.func @transform_2(%arg0: i32, %arg1: i32, %arg2: i32) -> (i32, i32) {
    %c0_i32 = arith.constant 0 : i32
    %c0_i32_0 = arith.constant 0 : i32
    return %c0_i32, %arg1 : i32, i32
  }
  func.func @transform_3(%arg0: i32, %arg1: i32, %arg2: i32) -> (i32, i32) {
    %c0_i32 = arith.constant 0 : i32
    return %arg0, %arg1 : i32, i32
  }
}

</mosaic_0001>

<llo_original>
// kernel: _tied_projection_2d.1
$region0: #{_tied_projection_2d.1}
  #allocation0 [shape = 'u32[]', space=smem, size = 0x4, offset = 0x4, fixed_abs, tag = 'smem constant byte address 0x4 - core index']
  #allocation1 [shape = 'u32[72,128]{1,0:T(1,128)}', space=vmem, size = 0x9000, scoped, tag = 'internal scratch']
  %s0 = inlined_call_operand.vmem [shape: f32[16,128], index: 0, kind: input, shape index: {}]
  %s1 = inlined_call_operand.vmem [shape: f32[128,128], index: 1, kind: input, shape index: {}]
  %s2 = inlined_call_operand.vmem [shape: f32[1,128], index: 2, kind: input, shape index: {}]
  %s3 = inlined_call_operand.hbm [shape: f32[16,128], index: 3, kind: output, shape index: {}]
  %s4 = sld [smem:[#allocation0]]
  $region45: #{_tied_projection_2d.1} parent=0
    _
  %s6 = ssub.s32 1, %s4
  %s7 = scalar_select 0, %s6, %s4
  $region1: #{_tied_projection_2d.1} parent=0
    #allocation2 [shape = 'u8[8192]{0}', space=vmem, size = 0x2000, scoped, tag = 'output window, operand 0']
    #allocation3 [shape = 's32[2]{0}', space=sflag, size = 0x8, scoped, tag = 'scoped memory for _tied_projection_2d.1']
    %8 = vsyncpa [#allocation3], 0
    %s9 = scalar_lea.sflag [#allocation3], 1
    %10 = vsyncpa %s9, 0
    loop: start=0, step=1, limit=4
    $region2: #{_tied_projection_2d.1} parent=1 // loop_pre_header
      _
    $region3: #{_tied_projection_2d.1} parent=1 // loop_header
      %s12 = sphi 0, %s16
      %p13 = scmp.ge.s32.totalorder %s12, 4
      %s19 = sphi 0, %s38
      %s20 = sphi 0, %s34
      %s21 = sphi 0, %s30
      %s22 = sphi 0, %s19
      %s23 = sphi 0, %s20
      %s24 = sphi 0, %s21
      %s25 = sphi 0, %s22
      %s26 = sphi 0, %s23
      %s27 = sphi 0, %s24
      %s43 = sphi 0, %s45
      %s46 = sphi 0, %s43
      %s47 = sphi 0, %s46
      %s63 = sphi 0, %s47
      %s71 = sphi 0, %s73
      %s74 = sphi 0, %s71
      %s75 = sphi 0, %s74
      %s91 = sphi 0, %s75
      %s97 = sphi 0, %s99
      %s100 = sphi 0, %s97
      %s101 = sphi 0, %s100
      %s117 = sphi 0, %s101
      %s125 = sphi 0, %s127
      %s128 = sphi 0, %s125
      %s129 = sphi 0, %s128
      %s145 = sphi 0, %s129
    $region4: #{_tied_projection_2d.1} parent=1 // loop_header_branch
      %15 = sbr.rel (%p13) target = $region8
    $region5: #{_tied_projection_2d.1} parent=1 // loop_body
      %s17 = ssub.s32 %s12, 1
      %s18 = ssub.s32 %s12, 2
      %s28 = sadd.s32 1, %s21
      %p29 = scmp.ge.s32.totalorder %s28, 1
      %s30 = scalar_select %p29, 0, %s28
      %s31 = sadd.s32 1, %s20
      %s32 = scalar_select %p29, %s31, %s20
      %p33 = scmp.ge.s32.totalorder %s32, 1
      %s34 = scalar_select %p33, 0, %s32
      %s35 = sadd.s32 1, %s19
      %s36 = scalar_select %p33, %s35, %s19
      %p37 = scmp.ge.s32.totalorder %s36, 2
      %s38 = scalar_select %p37, 0, %s36
      %s39 = ssub.s32 %s19, %s38
      %s40 = ssub.s32 %s21, %s30
      %s41 = sor.u32 %s39, %s40
      %p42 = scmp.eq.s32.totalorder %s41, 0
      %s44 = sadd.s32 %s43, 1
      %s45 = scalar_select %p42, %s43, %s44
      %p48 = pneg %p42
      %p49 = scmp.eq.s32.totalorder %s12, 1
      %p50 = por %p48, %p49
      %p51 = scmp.ne.s32.totalorder %s43, %s46
      %p52 = scmp.eq.s32.totalorder %s12, 0
      %p53 = por %p51, %p52
      %p54 = scmp.ne.s32.totalorder %s43, %s46
      %p55 = scmp.eq.s32.totalorder %s17, 1
      %p56 = por %p54, %p55
      %p57 = scmp.ne.s32.totalorder %s46, %s47
      %p58 = scmp.eq.s32.totalorder %s17, 0
      %p59 = por %p57, %p58
      %p60 = scmp.ne.s32.totalorder %s46, %s47
      %p61 = scmp.eq.s32.totalorder %s18, 1
      %p62 = por %p60, %p61
      %p64 = scmp.ne.s32.totalorder %s47, %s63
      %p65 = scmp.eq.s32.totalorder %s18, 0
      %p66 = por %p64, %p65
      %s67 = ssub.s32 %s20, %s34
      %s68 = ssub.s32 %s21, %s30
      %s69 = sor.u32 %s67, %s68
      %p70 = scmp.eq.s32.totalorder %s69, 0
      %s72 = sadd.s32 %s71, 1
      %s73 = scalar_select %p70, %s71, %s72
      %p76 = pneg %p70
      %p77 = scmp.eq.s32.totalorder %s12, 1
      %p78 = por %p76, %p77
      %p79 = scmp.ne.s32.totalorder %s71, %s74
      %p80 = scmp.eq.s32.totalorder %s12, 0
      %p81 = por %p79, %p80
      %p82 = scmp.ne.s32.totalorder %s71, %s74
      %p83 = scmp.eq.s32.totalorder %s17, 1
      %p84 = por %p82, %p83
      %p85 = scmp.ne.s32.totalorder %s74, %s75
      %p86 = scmp.eq.s32.totalorder %s17, 0
      %p87 = por %p85, %p86
      %p88 = scmp.ne.s32.totalorder %s74, %s75
      %p89 = scmp.eq.s32.totalorder %s18, 1
      %p90 = por %p88, %p89
      %p92 = scmp.ne.s32.totalorder %s75, %s91
      %p93 = scmp.eq.s32.totalorder %s18, 0
      %p94 = por %p92, %p93
      %s95 = ssub.s32 %s20, %s34
      %p96 = scmp.eq.s32.totalorder %s95, 0
      %s98 = sadd.s32 %s97, 1
      %s99 = scalar_select %p96, %s97, %s98
      %p102 = pneg %p96
      %p103 = scmp.eq.s32.totalorder %s12, 1
      %p104 = por %p102, %p103
      %p105 = scmp.ne.s32.totalorder %s97, %s100
      %p106 = scmp.eq.s32.totalorder %s12, 0
      %p107 = por %p105, %p106
      %p108 = scmp.ne.s32.totalorder %s97, %s100
      %p109 = scmp.eq.s32.totalorder %s17, 1
      %p110 = por %p108, %p109
      %p111 = scmp.ne.s32.totalorder %s100, %s101
      %p112 = scmp.eq.s32.totalorder %s17, 0
      %p113 = por %p111, %p112
      %p114 = scmp.ne.s32.totalorder %s100, %s101
      %p115 = scmp.eq.s32.totalorder %s18, 1
      %p116 = por %p114, %p115
      %p118 = scmp.ne.s32.totalorder %s101, %s117
      %p119 = scmp.eq.s32.totalorder %s18, 0
      %p120 = por %p118, %p119
      %s121 = ssub.s32 %s19, %s38
      %s122 = ssub.s32 %s20, %s34
      %s123 = sor.u32 %s121, %s122
      %p124 = scmp.eq.s32.totalorder %s123, 0
      %s126 = sadd.s32 %s125, 1
      %s127 = scalar_select %p124, %s125, %s126
      %p130 = pneg %p124
      %p131 = scmp.eq.s32.totalorder %s12, 1
      %p132 = por %p130, %p131
      %p133 = scmp.ne.s32.totalorder %s125, %s128
      %p134 = scmp.eq.s32.totalorder %s12, 0
      %p135 = por %p133, %p134
      %p136 = scmp.ne.s32.totalorder %s125, %s128
      %p137 = scmp.eq.s32.totalorder %s17, 1
      %p138 = por %p136, %p137
      %p139 = scmp.ne.s32.totalorder %s128, %s129
      %p140 = scmp.eq.s32.totalorder %s17, 0
      %p141 = por %p139, %p140
      %p142 = scmp.ne.s32.totalorder %s128, %s129
      %p143 = scmp.eq.s32.totalorder %s18, 1
      %p144 = por %p142, %p143
      %p146 = scmp.ne.s32.totalorder %s129, %s145
      %p147 = scmp.eq.s32.totalorder %s18, 0
      %p148 = por %p146, %p147
      %p149 = scmp.le.s32.totalorder 1, %s12
      %p150 = scmp.lt.s32.totalorder %s12, 3
      %p151 = pnand %p149, %p150
      %p152 = pneg %p151
      // Predicated region
      $region9: #{_tied_projection_2d.1} parent=5 // pred_check
        _
      $region10: #{_tied_projection_2d.1} parent=5 // pred_check_branch
        %154 = sbr.rel (%p151) target = $region12
      $region11: #{_tied_projection_2d.1} parent=5 // pred_region
        %s155 = ssub.s32 %s12, 1
        // Predicated region
        $region13: #{_tied_projection_2d.1} parent=11 // pred_check
          %p156 = pneg %p87
        $region14: #{_tied_projection_2d.1} parent=11 // pred_check_branch
          %158 = sbr.rel (%p156) target = $region16
        $region15: #{_tied_projection_2d.1} parent=11 // pred_region
          %s159 = smul.u32 16, %s23
          %p160 = scmp.lt.s32.totalorder %s159, 15
          %s161 = scalar_select %p160, %s159, 15
          %p162 = scmp.lt.s32.totalorder %s24, 0
          %s163 = scalar_select %p162, %s24, 0
          %s164 = sadd.s32 %s163, %s161
          %s165 = smul.addr %s164, 8
          %s166 = scalar_lea.vmem %s1, %s165
          %s167 = smul.u32 16, %s23
        $region16: #{_tied_projection_2d.1} parent=11 // pred_fallthru
          _
        // Predicated region
        $region17: #{_tied_projection_2d.1} parent=11 // pred_check
          %p168 = pneg %p113
        $region18: #{_tied_projection_2d.1} parent=11 // pred_check_branch
          %170 = sbr.rel (%p168) target = $region20
        $region19: #{_tied_projection_2d.1} parent=11 // pred_region
          %p171 = scmp.lt.s32.totalorder %s23, 0
          %s172 = scalar_select %p171, %s23, 0
          %s173 = scalar_lea.vmem %s2, %s172
        $region20: #{_tied_projection_2d.1} parent=11 // pred_fallthru
          _
      $region12: #{_tied_projection_2d.1} parent=5 // pred_fallthru
        _
      %p174 = scmp.lt.s32.totalorder %s12, 2
      // Predicated region
      $region21: #{_tied_projection_2d.1} parent=5 // pred_check
        %p175 = pneg %p174
      $region22: #{_tied_projection_2d.1} parent=5 // pred_check_branch
        %177 = sbr.rel (%p175) target = $region24
      $region23: #{_tied_projection_2d.1} parent=5 // pred_region
        // Predicated region
        $region25: #{_tied_projection_2d.1} parent=23 // pred_check
          %p178 = pneg %p53
        $region26: #{_tied_projection_2d.1} parent=23 // pred_check_branch
          %180 = sbr.rel (%p178) target = $region28
        $region27: #{_tied_projection_2d.1} parent=23 // pred_region
          %p181 = scmp.lt.s32.totalorder %s19, 1
          %s182 = scalar_select %p181, %s19, 1
          %p183 = scmp.lt.s32.totalorder %s21, 0
          %s184 = scalar_select %p183, %s21, 0
          %s185 = sadd.s32 %s184, %s182
          %s186 = smul.addr %s185, 8
          %s187 = scalar_lea.vmem %s0, %s186
        $region28: #{_tied_projection_2d.1} parent=23 // pred_fallthru
          _
      $region24: #{_tied_projection_2d.1} parent=5 // pred_fallthru
        _
      %p188 = scmp.le.s32.totalorder 1, %s12
      %p189 = scmp.lt.s32.totalorder %s12, 3
      %p190 = pnand %p188, %p189
      %p191 = pneg %p190
      // Predicated region
      $region29: #{_tied_projection_2d.1} parent=5 // pred_check
        _
      $region30: #{_tied_projection_2d.1} parent=5 // pred_check_branch
        %193 = sbr.rel (%p190) target = $region32
      $region31: #{_tied_projection_2d.1} parent=5 // pred_region
        %s194 = ssub.s32 %s12, 1
        %p195 = scmp.lt.s32.totalorder %s22, 1
        %s196 = scalar_select %p195, %s22, 1
        %p197 = scmp.lt.s32.totalorder %s24, 0
        %s198 = scalar_select %p197, %s24, 0
        %s199 = sadd.s32 %s198, %s196
        %s200 = smul.addr %s199, 8
        %s201 = scalar_lea.vmem %s0, %s200
        %p202 = pneg %p59
        %p203 = pneg %p56
        %s204 = smul.u32 16, %s23
        %p205 = scmp.lt.s32.totalorder %s204, 15
        %s206 = scalar_select %p205, %s204, 15
        %p207 = scmp.lt.s32.totalorder %s24, 0
        %s208 = scalar_select %p207, %s24, 0
        %s209 = sadd.s32 %s208, %s206
        %s210 = smul.addr %s209, 8
        %s211 = scalar_lea.vmem %s1, %s210
        %p212 = pneg %p87
        %p213 = pneg %p84
        %p214 = scmp.lt.s32.totalorder %s23, 0
        %s215 = scalar_select %p214, %s23, 0
        %s216 = scalar_lea.vmem %s2, %s215
        %p217 = pneg %p113
        %p218 = pneg %p110
        %p219 = pneg %p141
        %p220 = pneg %p138
        %s221 = sand.u32 %s128, 1
        %s222 = scalar_lea.sflag [#allocation3], %s221
        %s223 = sand.u32 %s128, 1
        %s224 = smul.addr %s223, 8
        %s225 = scalar_lea.vmem [#allocation2], %s224
        %p226 = scmp.lt.s32.totalorder %s22, 1
        %s227 = scalar_select %p226, %s22, 1
        %p228 = scmp.lt.s32.totalorder %s24, 0
        %s229 = scalar_select %p228, %s24, 0
        %s230 = sadd.s32 %s229, %s227
        %s231 = smul.addr %s230, 8
        %s232 = scalar_lea.vmem %s0, %s231
        %s233 = smul.u32 16, %s23
        %p234 = scmp.lt.s32.totalorder %s233, 15
        %s235 = scalar_select %p234, %s233, 15
        %p236 = scmp.lt.s32.totalorder %s24, 0
        %s237 = scalar_select %p236, %s24, 0
        %s238 = sadd.s32 %s237, %s235
        %s239 = smul.addr %s238, 8
        %s240 = scalar_lea.vmem %s1, %s239
        %s241 = smul.u32 16, %s23
        %p242 = scmp.lt.s32.totalorder %s23, 0
        %s243 = scalar_select %p242, %s23, 0
        %s244 = scalar_lea.vmem %s2, %s243
        %v245 = vld [vmem:[%s232] sm:$0xff]
        %v246 = vld [vmem:[%s240] sm:$0xff]
        %v247 = vld [vmem:[%s240 + $0x8] sm:$0xff]
        %v248 = vld [vmem:[%s240 + $0x10] sm:$0xff]
        %v249 = vld [vmem:[%s240 + $0x18] sm:$0xff]
        %v250 = vld [vmem:[%s240 + $0x20] sm:$0xff]
        %v251 = vld [vmem:[%s240 + $0x28] sm:$0xff]
        %v252 = vld [vmem:[%s240 + $0x30] sm:$0xff]
        %v253 = vld [vmem:[%s240 + $0x38] sm:$0xff]
        %v254 = vld [vmem:[%s240 + $0x40] sm:$0xff]
        %v255 = vld [vmem:[%s240 + $0x48] sm:$0xff]
        %v256 = vld [vmem:[%s240 + $0x50] sm:$0xff]
        %v257 = vld [vmem:[%s240 + $0x58] sm:$0xff]
        %v258 = vld [vmem:[%s240 + $0x60] sm:$0xff]
        %v259 = vld [vmem:[%s240 + $0x68] sm:$0xff]
        %v260 = vld [vmem:[%s240 + $0x70] sm:$0xff]
        %v261 = vld [vmem:[%s240 + $0x78] sm:$0xff]
        %v262 = vld [vmem:[%s244] sm:$0x1]
        %v264 = vperm.slane %v262, 0
        %266 = vmatpush.xpose.msra.mxu0 %v261
        %267 = vmatpush.xpose.msra.mxu0 %v260
        %268 = vmatpush.xpose.msra.mxu0 %v259
        %269 = vmatpush.xpose.msra.mxu0 %v258
        %270 = vmatpush.xpose.msra.mxu0 %v257
        %271 = vmatpush.xpose.msra.mxu0 %v256
        %272 = vmatpush.xpose.msra.mxu0 %v255
        %273 = vmatpush.xpose.msra.mxu0 %v254
        %274 = vmatpush.xpose.msra.mxu0 %v253
        %275 = vmatpush.xpose.msra.mxu0 %v252
        %276 = vmatpush.xpose.msra.mxu0 %v251
        %277 = vmatpush.xpose.msra.mxu0 %v250
        %278 = vmatpush.xpose.msra.mxu0 %v249
        %279 = vmatpush.xpose.msra.mxu0 %v248
        %280 = vmatpush.xpose.msra.mxu0 %v247
        %281 = vmatpush.xpose.msra.mxu0 %v246
        %282 = vmatmul.f32.gmra.mxu0 %v245
        %v283 = vpop.f32.mrf.mxu0
        %v284 = vadd.f32 %v264, %v283
        %285 = vdwg.mxu0
        %286 = vst [vmem:[%s225] sm:$0xff] %v284
        %s287 = sand.u32 %s128, 1
        %s288 = scalar_lea.sflag [#allocation3], %s287
        %s289 = sand.u32 %s128, 1
        %s290 = smul.addr %s289, 8
        %s291 = scalar_lea.vmem [#allocation2], %s290
        // Predicated region
        $region33: #{_tied_projection_2d.1} parent=31 // pred_check
          %p292 = pneg %p138
        $region34: #{_tied_projection_2d.1} parent=31 // pred_check_branch
          %294 = sbr.rel (%p292) target = $region36
        $region35: #{_tied_projection_2d.1} parent=31 // pred_region
          %296 = vsyncadd %s288, 0
          %s297 = sadd.s32 %s23, %s22
          %s298 = smul.addr %s297, 8
          %s299 = scalar_lea.hbm %s3, %s298
          %s301 = sshll.u32 %s291, 4
          %s302 = int_to_ptr.vmem [resolvable:$true] %s301
          %s303 = sshll.u32 %s299, 4
          %s304 = int_to_ptr.hbm [resolvable:$true] %s303
          %306 = dma.vmem_to_hbm [thread:$0]  %s302, 128, %s304, %s288
        $region36: #{_tied_projection_2d.1} parent=31 // pred_fallthru
          _
      $region32: #{_tied_projection_2d.1} parent=5 // pred_fallthru
        _
      %p307 = scmp.le.s32.totalorder 2, %s12
      // Predicated region
      $region37: #{_tied_projection_2d.1} parent=5 // pred_check
        %p308 = pneg %p307
      $region38: #{_tied_projection_2d.1} parent=5 // pred_check_branch
        %310 = sbr.rel (%p308) target = $region40
      $region39: #{_tied_projection_2d.1} parent=5 // pred_region
        %s311 = ssub.s32 %s12, 2
        // Predicated region
        $region41: #{_tied_projection_2d.1} parent=39 // pred_check
          %p312 = pneg %p144
        $region42: #{_tied_projection_2d.1} parent=39 // pred_check_branch
          %314 = sbr.rel (%p312) target = $region44
        $region43: #{_tied_projection_2d.1} parent=39 // pred_region
          %s315 = sand.u32 %s129, 1
          %s316 = scalar_lea.sflag [#allocation3], %s315
          %s317 = sand.u32 %s129, 1
          %s318 = smul.addr %s317, 8
          %s319 = scalar_lea.vmem [#allocation2], %s318
          %321 = dma.done %s316, 128
        $region44: #{_tied_projection_2d.1} parent=39 // pred_fallthru
          _
      $region40: #{_tied_projection_2d.1} parent=5 // pred_fallthru
        _
    $region6: #{_tied_projection_2d.1} parent=1 // loop_footer
      %s16 = sadd.s32 1, %s12
    $region7: #{_tied_projection_2d.1} parent=1 // loop_footer_branch
      %11 = sbr.rel target = $region3
    $region8: #{_tied_projection_2d.1} parent=1 // loop_exit
      _
    %322 = vsyncpa [#allocation3], 1
    %s323 = scalar_lea.sflag [#allocation3], 1
    %324 = vsyncpa %s323, 1

</llo_original>
